<compile_context>
chip_gen: v5e
topology: v5e:2x2
jax: 0.10.0
libtpu: 0.0.40
codegen_flags: <defaults>
</compile_context>

<pallas_src>
import functools

import jax
import jax.numpy as jnp
from jax import lax
from jax.experimental import pallas as pl
from jax.experimental.pallas import tpu as pltpu

EPS = 1e-5


def _round_up(x, m):
    return (x + m - 1) // m * m


# ---------------------------------------------------------------------------
# Pallas kernel: one batch element per grid step.
#   x_ref   : (H, W, Cin)     un-padded NHWC input (bf16 or f32)
#   dww_ref : (9, Cin)        depthwise taps * BN scale, row-major ky*3+kx (f32)
#   dwb_ref : (1, 1, Cin)     folded depthwise bias (f32)
#   pww_ref : (Cout, Cin)     pointwise weights * BN scale (mxu dtype)
#   pwb_ref : (Cout, 1)       folded pointwise bias (f32)
#   out_ref : (Cout, Ho*Wo)   channel-major (NCHW-order) output block
#   scratch : [(Ho*W, Cin) f32]   only when S > 1 (column-stride subsample)
# ---------------------------------------------------------------------------
def _ds_conv_kernel(x_ref, dww_ref, dwb_ref, pww_ref, pwb_ref, out_ref,
                    *scratch, H, W, Cin, S, mxu_dtype):
    Ho, Wo = H // S, W // S

    x = x_ref[...].astype(jnp.float32)                        # (H, W, Cin)

    # Reflect-pad the rows in VMEM: pad row -1 -> row 1, pad row H -> row H-2.
    # Leading-dim concat = cheap slab placement, no HBM copy.
    xp = jnp.concatenate([x[1:2], x, x[H - 2:H - 1]], axis=0)  # (H+2, W, Cin)

    # Row-stride subsample BEFORE the tap MACs (free leading-dim reshape), so
    # the whole depthwise stage only touches the Ho kept rows.
    def rows(ky):
        t = xp[ky:ky + H]                                      # (H, W, Cin)
        if S > 1:
            t = t.reshape(Ho, S, W, Cin)[:, 0]                 # (Ho, W, Cin)
        return t

    s0, s1, s2 = rows(0), rows(1), rows(2)

    # 3x3 depthwise taps grouped per column offset kx (VPU multiply-adds).
    def col_group(kx):
        return (s0 * dww_ref[0 * 3 + kx, :]
                + s1 * dww_ref[1 * 3 + kx, :]
                + s2 * dww_ref[2 * 3 + kx, :])                 # (Ho, W, Cin)

    cg0, cg1, cg2 = col_group(0), col_group(1), col_group(2)

    # Column shifts on the XLU; the reflect border (col -1 -> col 1,
    # col W -> col W-2) is patched with a one-column select.
    col = lax.broadcasted_iota(jnp.int32, (Ho, W, Cin), 1)
    left = jnp.where(col == 0, cg0[:, 1:2, :],
                     pltpu.roll(cg0, shift=1, axis=1))         # cg0 at col w-1
    right = jnp.where(col == W - 1, cg2[:, W - 2:W - 1, :],
                      pltpu.roll(cg2, shift=W - 1, axis=1))    # cg2 at col w+1
    acc = cg1 + left + right                                   # (Ho, W, Cin)

    # Folded depthwise BN bias + ReLU6; flatten pixels (free when W % 8 == 0).
    y = jnp.clip(acc + dwb_ref[...], 0.0, 6.0)                 # (Ho, W, Cin)
    lhs = y.reshape(Ho * W, Cin)

    # Column stride: the strided pixels are every S-th row of the flattened
    # (Ho*W, Cin) array -> one native sublane-strided read from VMEM scratch.
    # (Scratch stays f32: sublane-strided loads want 32-bit elements.)
    if S > 1:
        lhs_scr, = scratch
        lhs_scr[...] = lhs
        lhs = lhs_scr[pl.ds(0, Ho * Wo, stride=S), :]          # (Ho*Wo, Cin)

    # Pointwise 1x1 conv on the MXU, channel-major result: (Cout, Cin)
    # contracted with (P, Cin) on the channel dim -> (Cout, P).  The lane dim
    # is the pixel count (lane-dense for realistic H*W), there is no
    # Cout->128 padding, and the store is already in NCHW order.
    z = lax.dot_general(pww_ref[...], lhs.astype(mxu_dtype),
                        dimension_numbers=(((1,), (1,)), ((), ())),
                        preferred_element_type=jnp.float32)    # (Cout, Ho*Wo)
    out_ref[...] = jnp.clip(z + pwb_ref[...], 0.0, 6.0).astype(out_ref.dtype)


# ---------------------------------------------------------------------------
# Wrapper: NCHW in, NCHW out (PyTorch convention).
# ---------------------------------------------------------------------------
def depth_separable_conv_pallas(x_nchw, p, strides, *, precision="bf16"):
    N, Cin, H, W = x_nchw.shape
    Cout = p["pw_w"].shape[0]
    S = int(strides)
    # Fragile invariants the kernel relies on (per review): assert them.
    assert H % S == 0 and W % S == 0, "spatial dims must be divisible by stride"
    assert H >= 2 and W >= 2, "reflect padding of 1 needs H, W >= 2"
    Ho, Wo = H // S, W // S

    if precision == "bf16":
        in_dtype = mxu_dtype = out_dtype = jnp.bfloat16
    elif precision == "f32":
        in_dtype = mxu_dtype = out_dtype = jnp.float32
    else:
        raise ValueError(precision)

    # NCHW -> NHWC + activation-dtype cast: one fused XLA pass.  The reflect
    # padding happens inside the kernel, so no padded HBM copy is made.
    x_nhwc = jnp.transpose(x_nchw, (0, 2, 3, 1)).astype(in_dtype)

    # depthwise: (Cin,1,3,3) -> (9, Cin); BN scale folded into the taps.
    dw_scale = p["dw_gamma"] / jnp.sqrt(p["dw_var"] + EPS)
    dww = (jnp.transpose(p["dw_w"][:, 0, :, :], (1, 2, 0)).reshape(9, Cin)
           * dw_scale[None, :]).astype(jnp.float32)
    dwb = (p["dw_beta"] + dw_scale * (p["dw_b"] - p["dw_mean"])
           ).reshape(1, 1, Cin).astype(jnp.float32)

    # pointwise: (Cout,Cin,1,1) -> (Cout, Cin); BN scale folded, no padding.
    pw_scale = p["pw_gamma"] / jnp.sqrt(p["pw_var"] + EPS)
    pww = (p["pw_w"][:, :, 0, 0] * pw_scale[:, None]).astype(mxu_dtype)
    pwb = (p["pw_beta"] + pw_scale * (p["pw_b"] - p["pw_mean"])
           ).reshape(Cout, 1).astype(jnp.float32)

    kernel = functools.partial(_ds_conv_kernel, H=H, W=W, Cin=Cin, S=S,
                               mxu_dtype=mxu_dtype)
    scratch_shapes = ([pltpu.VMEM((Ho * W, Cin), jnp.float32)] if S > 1 else [])

    # VMEM budget: double-buffered in/out blocks + scratch + the f32 working
    # copies the depthwise stage materializes; clamped to the device's VMEM
    # (v7x has 64 MiB/TC, v5e/v6e 128 MiB).
    in_b = H * _round_up(W, 16) * _round_up(Cin, 128) * jnp.dtype(in_dtype).itemsize
    wrk = (H + 2) * _round_up(W, 8) * _round_up(Cin, 128) * 4
    out_b = (_round_up(Cout, 8) * _round_up(Ho * Wo, 128)
             * jnp.dtype(out_dtype).itemsize)
    scr_b = (_round_up(Ho * W, 8) * _round_up(Cin, 128) * 4) if S > 1 else 0
    need = 2 * (in_b + out_b) + scr_b + 6 * wrk + (8 << 20)
    try:
        cap = int(pltpu.get_tpu_info().vmem_capacity_bytes)
    except Exception:
        cap = 64 << 20
    vmem_limit = int(min(cap - (2 << 20), max(32 << 20, need)))

    out_flat = pl.pallas_call(
        kernel,
        out_shape=jax.ShapeDtypeStruct((N, Cout, Ho * Wo), out_dtype),
        grid_spec=pltpu.PrefetchScalarGridSpec(
            num_scalar_prefetch=0,
            grid=(N,),
            in_specs=[
                pl.BlockSpec((None, H, W, Cin), lambda n: (n, 0, 0, 0)),
                pl.BlockSpec((9, Cin), lambda n: (0, 0)),
                pl.BlockSpec((1, 1, Cin), lambda n: (0, 0, 0)),
                pl.BlockSpec((Cout, Cin), lambda n: (0, 0)),
                pl.BlockSpec((Cout, 1), lambda n: (0, 0)),
            ],
            out_specs=pl.BlockSpec((None, Cout, Ho * Wo), lambda n: (n, 0, 0)),
            scratch_shapes=scratch_shapes,
        ),
        compiler_params=pltpu.CompilerParams(
            dimension_semantics=("parallel",),
            vmem_limit_bytes=vmem_limit,
        ),
    )(x_nhwc, dww, dwb, pww, pwb)

    # (N, Cout, Ho*Wo) -> (N, Cout, Ho, Wo) is a free metadata reshape (NCHW);
    # no post-kernel transpose / un-pad HBM pass anymore.
    return out_flat.reshape(N, Cout, Ho, Wo)


# ---------------------------------------------------------------------------
# Pure-JAX reference (mirrors the PyTorch forward, BN in eval mode).
# ---------------------------------------------------------------------------
def depth_separable_conv_ref(x_nchw, p, strides):
    Cin = x_nchw.shape[1]
    xpad = jnp.pad(x_nchw, ((0, 0), (0, 0), (1, 1), (1, 1)), mode="reflect")
    y = lax.conv_general_dilated(
        xpad, p["dw_w"], (strides, strides), "VALID",
        feature_group_count=Cin, dimension_numbers=("NCHW", "OIHW", "NCHW"))
    y = y + p["dw_b"][None, :, None, None]
    y = ((y - p["dw_mean"][None, :, None, None])
         / jnp.sqrt(p["dw_var"] + EPS)[None, :, None, None]
         * p["dw_gamma"][None, :, None, None]
         + p["dw_beta"][None, :, None, None])
    y = jnp.clip(y, 0.0, 6.0)
    z = lax.conv_general_dilated(
        y, p["pw_w"], (1, 1), "VALID",
        dimension_numbers=("NCHW", "OIHW", "NCHW"))
    z = z + p["pw_b"][None, :, None, None]
    z = ((z - p["pw_mean"][None, :, None, None])
         / jnp.sqrt(p["pw_var"] + EPS)[None, :, None, None]
         * p["pw_gamma"][None, :, None, None]
         + p["pw_beta"][None, :, None, None])
    return jnp.clip(z, 0.0, 6.0)


def init_params(key, Cin, Cout):
    ks = jax.random.split(key, 12)
    return {
        # depthwise conv + BN
        "dw_w": 0.3 * jax.random.normal(ks[0], (Cin, 1, 3, 3), jnp.float32),
        "dw_b": 0.1 * jax.random.normal(ks[1], (Cin,), jnp.float32),
        "dw_gamma": 1.0 + 0.1 * jax.random.normal(ks[2], (Cin,), jnp.float32),
        "dw_beta": 0.1 * jax.random.normal(ks[3], (Cin,), jnp.float32),
        "dw_mean": 0.1 * jax.random.normal(ks[4], (Cin,), jnp.float32),
        "dw_var": 0.5 + jnp.abs(jax.random.normal(ks[5], (Cin,), jnp.float32)),
        # pointwise conv + BN
        "pw_w": 0.3 * jax.random.normal(ks[6], (Cout, Cin, 1, 1), jnp.float32),
        "pw_b": 0.1 * jax.random.normal(ks[7], (Cout,), jnp.float32),
        "pw_gamma": 1.0 + 0.1 * jax.random.normal(ks[8], (Cout,), jnp.float32),
        "pw_beta": 0.1 * jax.random.normal(ks[9], (Cout,), jnp.float32),
        "pw_mean": 0.1 * jax.random.normal(ks[10], (Cout,), jnp.float32),
        "pw_var": 0.5 + jnp.abs(jax.random.normal(ks[11], (Cout,), jnp.float32)),
    }


if __name__ == "__main__":
    N, Cin, Cout, H, W = 2, 4, 8, 16, 16

    key = jax.random.PRNGKey(0)
    kx, kp = jax.random.split(key)
    x = jax.random.normal(kx, (N, Cin, H, W), jnp.float32)   # NCHW, like PyTorch
    params = init_params(kp, Cin, Cout)

    for strides in (2, 1):
        ref = depth_separable_conv_ref(x, params, strides)

        # strict check: all-f32 path must match the PyTorch-style reference.
        out_f32 = jax.block_until_ready(
            depth_separable_conv_pallas(x, params, strides, precision="f32"))
        assert out_f32.shape == ref.shape, (out_f32.shape, ref.shape)
        assert jnp.allclose(out_f32, ref, atol=2e-4, rtol=2e-4), float(
            jnp.max(jnp.abs(out_f32 - ref)))

        # bf16 fast path (bf16 HBM activations in/out, bf16 MXU, f32 depthwise
        # accumulation): loose tolerance from the ~2^-9 relative bf16 rounding.
        out_bf16 = jax.block_until_ready(
            depth_separable_conv_pallas(x, params, strides, precision="bf16"))
        assert out_bf16.shape == ref.shape and out_bf16.dtype == jnp.bfloat16
        err = jnp.abs(out_bf16.astype(jnp.float32) - ref)
        assert float(jnp.max(err)) < 1.5e-1, float(jnp.max(err))
        assert float(jnp.mean(err)) < 2e-2, float(jnp.mean(err))

    print("KERNEL_OK")
</pallas_src>

<mosaic_0001>
module attributes {stable_mosaic.version = 11 : i64} {
  func.func @_ds_conv_kernel(%arg0: i32, %arg1: memref<1x16x16x4xf32, #tpu.memory_space<vmem>>, %arg2: memref<9x4xf32, #tpu.memory_space<vmem>>, %arg3: memref<1x1x4xf32, #tpu.memory_space<vmem>>, %arg4: memref<8x4xf32, #tpu.memory_space<vmem>>, %arg5: memref<8x1xf32, #tpu.memory_space<vmem>>, %arg6: memref<1x8x64xf32, #tpu.memory_space<vmem>>, %arg7: memref<128x4xf32, #tpu.memory_space<vmem>>) attributes {dimension_semantics = [#tpu.dimension_semantics<parallel>], iteration_bounds = array<i64: 2>, scalar_prefetch = 0 : i64, scratch_operands = 1 : i64, tpu.core_type = #tpu.core_type<tc>, window_params = [{transform_indices = @transform_0, window_bounds = array<i64: 1, 16, 16, 4>}, {pipeline_mode = #tpu.pipeline_mode<synchronous>, transform_indices = @transform_1, window_bounds = array<i64: 9, 4>}, {pipeline_mode = #tpu.pipeline_mode<synchronous>, transform_indices = @transform_2, window_bounds = array<i64: 1, 1, 4>}, {pipeline_mode = #tpu.pipeline_mode<synchronous>, transform_indices = @transform_3, window_bounds = array<i64: 8, 4>}, {pipeline_mode = #tpu.pipeline_mode<synchronous>, transform_indices = @transform_4, window_bounds = array<i64: 8, 1>}, {transform_indices = @transform_5, window_bounds = array<i64: 1, 8, 64>}]} {
    %c0 = arith.constant 0 : index
    %c0_0 = arith.constant 0 : index
    %c0_1 = arith.constant 0 : index
    %c0_2 = arith.constant 0 : index
    %0 = vector.load %arg1[%c0, %c0_0, %c0_1, %c0_2] : memref<1x16x16x4xf32, #tpu.memory_space<vmem>>, vector<1x16x16x4xf32>
    %1 = vector.shape_cast %0 : vector<1x16x16x4xf32> to vector<16x16x4xf32>
    %2 = vector.extract_strided_slice %1 {offsets = [1, 0, 0], sizes = [1, 16, 4], strides = [1, 1, 1]} : vector<16x16x4xf32> to vector<1x16x4xf32>
    %3 = vector.extract_strided_slice %1 {offsets = [14, 0, 0], sizes = [1, 16, 4], strides = [1, 1, 1]} : vector<16x16x4xf32> to vector<1x16x4xf32>
    %4 = tpu.concatenate %2, %1, %3 in 0 : vector<1x16x4xf32>, vector<16x16x4xf32>, vector<1x16x4xf32> -> vector<18x16x4xf32>
    %5 = vector.extract_strided_slice %4 {offsets = [0, 0, 0], sizes = [16, 16, 4], strides = [1, 1, 1]} : vector<18x16x4xf32> to vector<16x16x4xf32>
    %6 = vector.shape_cast %5 : vector<16x16x4xf32> to vector<8x2x16x4xf32>
    %7 = vector.extract_strided_slice %6 {offsets = [0, 0, 0, 0], sizes = [8, 1, 16, 4], strides = [1, 1, 1, 1]} : vector<8x2x16x4xf32> to vector<8x1x16x4xf32>
    %8 = vector.shape_cast %7 : vector<8x1x16x4xf32> to vector<8x16x4xf32>
    %9 = vector.extract_strided_slice %4 {offsets = [1, 0, 0], sizes = [16, 16, 4], strides = [1, 1, 1]} : vector<18x16x4xf32> to vector<16x16x4xf32>
    %10 = vector.shape_cast %9 : vector<16x16x4xf32> to vector<8x2x16x4xf32>
    %11 = vector.extract_strided_slice %10 {offsets = [0, 0, 0, 0], sizes = [8, 1, 16, 4], strides = [1, 1, 1, 1]} : vector<8x2x16x4xf32> to vector<8x1x16x4xf32>
    %12 = vector.shape_cast %11 : vector<8x1x16x4xf32> to vector<8x16x4xf32>
    %13 = vector.extract_strided_slice %4 {offsets = [2, 0, 0], sizes = [16, 16, 4], strides = [1, 1, 1]} : vector<18x16x4xf32> to vector<16x16x4xf32>
    %14 = vector.shape_cast %13 : vector<16x16x4xf32> to vector<8x2x16x4xf32>
    %15 = vector.extract_strided_slice %14 {offsets = [0, 0, 0, 0], sizes = [8, 1, 16, 4], strides = [1, 1, 1, 1]} : vector<8x2x16x4xf32> to vector<8x1x16x4xf32>
    %16 = vector.shape_cast %15 : vector<8x1x16x4xf32> to vector<8x16x4xf32>
    %c0_3 = arith.constant 0 : index
    %c0_4 = arith.constant 0 : index
    %17 = vector.load %arg2[%c0_3, %c0_4] : memref<9x4xf32, #tpu.memory_space<vmem>>, vector<1x4xf32>
    %18 = vector.shape_cast %17 : vector<1x4xf32> to vector<4xf32>
    %19 = vector.shape_cast %18 : vector<4xf32> to vector<1x1x4xf32>
    %20 = vector.broadcast %19 : vector<1x1x4xf32> to vector<8x16x4xf32>
    %21 = arith.mulf %8, %20 : vector<8x16x4xf32>
    %c3 = arith.constant 3 : index
    %c0_5 = arith.constant 0 : index
    %22 = vector.load %arg2[%c3, %c0_5] : memref<9x4xf32, #tpu.memory_space<vmem>>, vector<1x4xf32>
    %23 = vector.shape_cast %22 : vector<1x4xf32> to vector<4xf32>
    %24 = vector.shape_cast %23 : vector<4xf32> to vector<1x1x4xf32>
    %25 = vector.broadcast %24 : vector<1x1x4xf32> to vector<8x16x4xf32>
    %26 = arith.mulf %12, %25 : vector<8x16x4xf32>
    %27 = arith.addf %21, %26 : vector<8x16x4xf32>
    %c6 = arith.constant 6 : index
    %c0_6 = arith.constant 0 : index
    %28 = vector.load %arg2[%c6, %c0_6] : memref<9x4xf32, #tpu.memory_space<vmem>>, vector<1x4xf32>
    %29 = vector.shape_cast %28 : vector<1x4xf32> to vector<4xf32>
    %30 = vector.shape_cast %29 : vector<4xf32> to vector<1x1x4xf32>
    %31 = vector.broadcast %30 : vector<1x1x4xf32> to vector<8x16x4xf32>
    %32 = arith.mulf %16, %31 : vector<8x16x4xf32>
    %33 = arith.addf %27, %32 : vector<8x16x4xf32>
    %c1 = arith.constant 1 : index
    %c0_7 = arith.constant 0 : index
    %34 = vector.load %arg2[%c1, %c0_7] : memref<9x4xf32, #tpu.memory_space<vmem>>, vector<1x4xf32>
    %35 = vector.shape_cast %34 : vector<1x4xf32> to vector<4xf32>
    %36 = vector.shape_cast %35 : vector<4xf32> to vector<1x1x4xf32>
    %37 = vector.broadcast %36 : vector<1x1x4xf32> to vector<8x16x4xf32>
    %38 = arith.mulf %8, %37 : vector<8x16x4xf32>
    %c4 = arith.constant 4 : index
    %c0_8 = arith.constant 0 : index
    %39 = vector.load %arg2[%c4, %c0_8] : memref<9x4xf32, #tpu.memory_space<vmem>>, vector<1x4xf32>
    %40 = vector.shape_cast %39 : vector<1x4xf32> to vector<4xf32>
    %41 = vector.shape_cast %40 : vector<4xf32> to vector<1x1x4xf32>
    %42 = vector.broadcast %41 : vector<1x1x4xf32> to vector<8x16x4xf32>
    %43 = arith.mulf %12, %42 : vector<8x16x4xf32>
    %44 = arith.addf %38, %43 : vector<8x16x4xf32>
    %c7 = arith.constant 7 : index
    %c0_9 = arith.constant 0 : index
    %45 = vector.load %arg2[%c7, %c0_9] : memref<9x4xf32, #tpu.memory_space<vmem>>, vector<1x4xf32>
    %46 = vector.shape_cast %45 : vector<1x4xf32> to vector<4xf32>
    %47 = vector.shape_cast %46 : vector<4xf32> to vector<1x1x4xf32>
    %48 = vector.broadcast %47 : vector<1x1x4xf32> to vector<8x16x4xf32>
    %49 = arith.mulf %16, %48 : vector<8x16x4xf32>
    %50 = arith.addf %44, %49 : vector<8x16x4xf32>
    %c2 = arith.constant 2 : index
    %c0_10 = arith.constant 0 : index
    %51 = vector.load %arg2[%c2, %c0_10] : memref<9x4xf32, #tpu.memory_space<vmem>>, vector<1x4xf32>
    %52 = vector.shape_cast %51 : vector<1x4xf32> to vector<4xf32>
    %53 = vector.shape_cast %52 : vector<4xf32> to vector<1x1x4xf32>
    %54 = vector.broadcast %53 : vector<1x1x4xf32> to vector<8x16x4xf32>
    %55 = arith.mulf %8, %54 : vector<8x16x4xf32>
    %c5 = arith.constant 5 : index
    %c0_11 = arith.constant 0 : index
    %56 = vector.load %arg2[%c5, %c0_11] : memref<9x4xf32, #tpu.memory_space<vmem>>, vector<1x4xf32>
    %57 = vector.shape_cast %56 : vector<1x4xf32> to vector<4xf32>
    %58 = vector.shape_cast %57 : vector<4xf32> to vector<1x1x4xf32>
    %59 = vector.broadcast %58 : vector<1x1x4xf32> to vector<8x16x4xf32>
    %60 = arith.mulf %12, %59 : vector<8x16x4xf32>
    %61 = arith.addf %55, %60 : vector<8x16x4xf32>
    %c8 = arith.constant 8 : index
    %c0_12 = arith.constant 0 : index
    %62 = vector.load %arg2[%c8, %c0_12] : memref<9x4xf32, #tpu.memory_space<vmem>>, vector<1x4xf32>
    %63 = vector.shape_cast %62 : vector<1x4xf32> to vector<4xf32>
    %64 = vector.shape_cast %63 : vector<4xf32> to vector<1x1x4xf32>
    %65 = vector.broadcast %64 : vector<1x1x4xf32> to vector<8x16x4xf32>
    %66 = arith.mulf %16, %65 : vector<8x16x4xf32>
    %67 = arith.addf %61, %66 : vector<8x16x4xf32>
    %68 = tpu.iota {dimensions = array<i32: 1>} : vector<8x16x4xi32>
    %c0_i32 = arith.constant 0 : i32
    %69 = vector.broadcast %c0_i32 : i32 to vector<8x16x4xi32>
    %70 = arith.cmpi eq, %68, %69 : vector<8x16x4xi32>
    %71 = vector.extract_strided_slice %33 {offsets = [0, 1, 0], sizes = [8, 1, 4], strides = [1, 1, 1]} : vector<8x16x4xf32> to vector<8x1x4xf32>
    %c1_i32 = arith.constant 1 : i32
    %72 = tpu.dynamic_rotate %33 by %c1_i32 dim 1 : vector<8x16x4xf32>, i32 -> vector<8x16x4xf32>
    %73 = vector.shape_cast %71 : vector<8x1x4xf32> to vector<8x1x4xf32>
    %74 = vector.broadcast %73 : vector<8x1x4xf32> to vector<8x16x4xf32>
    %75 = arith.select %70, %74, %72 : vector<8x16x4xi1>, vector<8x16x4xf32>
    %c15_i32 = arith.constant 15 : i32
    %76 = vector.broadcast %c15_i32 : i32 to vector<8x16x4xi32>
    %77 = arith.cmpi eq, %68, %76 : vector<8x16x4xi32>
    %78 = vector.extract_strided_slice %67 {offsets = [0, 14, 0], sizes = [8, 1, 4], strides = [1, 1, 1]} : vector<8x16x4xf32> to vector<8x1x4xf32>
    %c15_i32_13 = arith.constant 15 : i32
    %79 = tpu.dynamic_rotate %67 by %c15_i32_13 dim 1 : vector<8x16x4xf32>, i32 -> vector<8x16x4xf32>
    %80 = vector.shape_cast %78 : vector<8x1x4xf32> to vector<8x1x4xf32>
    %81 = vector.broadcast %80 : vector<8x1x4xf32> to vector<8x16x4xf32>
    %82 = arith.select %77, %81, %79 : vector<8x16x4xi1>, vector<8x16x4xf32>
    %83 = arith.addf %50, %75 : vector<8x16x4xf32>
    %84 = arith.addf %83, %82 : vector<8x16x4xf32>
    %c0_14 = arith.constant 0 : index
    %c0_15 = arith.constant 0 : index
    %c0_16 = arith.constant 0 : index
    %85 = vector.load %arg3[%c0_14, %c0_15, %c0_16] : memref<1x1x4xf32, #tpu.memory_space<vmem>>, vector<1x1x4xf32>
    %86 = vector.broadcast %85 : vector<1x1x4xf32> to vector<8x16x4xf32>
    %87 = arith.addf %84, %86 : vector<8x16x4xf32>
    %cst = arith.constant 0.000000e+00 : f32
    %cst_17 = arith.constant 6.000000e+00 : f32
    %88 = vector.broadcast %cst : f32 to vector<8x16x4xf32>
    %89 = arith.maximumf %88, %87 : vector<8x16x4xf32>
    %90 = vector.broadcast %cst_17 : f32 to vector<8x16x4xf32>
    %91 = arith.minimumf %90, %89 : vector<8x16x4xf32>
    %92 = vector.shape_cast %91 : vector<8x16x4xf32> to vector<128x4xf32>
    %c0_18 = arith.constant 0 : index
    %c0_19 = arith.constant 0 : index
    %93 = vector.load %arg7[%c0_18, %c0_19] : memref<128x4xf32, #tpu.memory_space<vmem>>, vector<128x4xf32>
    tpu.vector_store %arg7[%c0_18, %c0_19], %92 {strides = array<i32>} : memref<128x4xf32, #tpu.memory_space<vmem>>, vector<128x4xf32>,
    %c0_20 = arith.constant 0 : index
    %c0_21 = arith.constant 0 : index
    %94 = tpu.strided_load %arg7[%c0_20, %c0_21] {strides = array<i32: 2, 1>} : memref<128x4xf32, #tpu.memory_space<vmem>>, vector<64x4xf32>
    %c0_22 = arith.constant 0 : index
    %c0_23 = arith.constant 0 : index
    %95 = vector.load %arg4[%c0_22, %c0_23] : memref<8x4xf32, #tpu.memory_space<vmem>>, vector<8x4xf32>
    %cst_24 = arith.constant dense<0.000000e+00> : vector<8x64xf32>
    %96 = tpu.matmul %95, %94, %cst_24 {dimension_numbers = #tpu.dot_dimension_numbers<[1], [1], [0], [0], [0, 0, 1, 0], [], []>} : vector<8x4xf32>, vector<64x4xf32>, vector<8x64xf32> -> vector<8x64xf32>
    %c0_25 = arith.constant 0 : index
    %c0_26 = arith.constant 0 : index
    %97 = vector.load %arg5[%c0_25, %c0_26] : memref<8x1xf32, #tpu.memory_space<vmem>>, vector<8x1xf32>
    %98 = vector.broadcast %97 : vector<8x1xf32> to vector<8x64xf32>
    %99 = arith.addf %96, %98 : vector<8x64xf32>
    %cst_27 = arith.constant 0.000000e+00 : f32
    %cst_28 = arith.constant 6.000000e+00 : f32
    %100 = vector.broadcast %cst_27 : f32 to vector<8x64xf32>
    %101 = arith.maximumf %100, %99 : vector<8x64xf32>
    %102 = vector.broadcast %cst_28 : f32 to vector<8x64xf32>
    %103 = arith.minimumf %102, %101 : vector<8x64xf32>
    %c0_29 = arith.constant 0 : index
    %c0_30 = arith.constant 0 : index
    %c0_31 = arith.constant 0 : index
    %104 = vector.load %arg6[%c0_29, %c0_30, %c0_31] : memref<1x8x64xf32, #tpu.memory_space<vmem>>, vector<1x8x64xf32>
    %105 = vector.shape_cast %104 : vector<1x8x64xf32> to vector<8x64xf32>
    %106 = vector.shape_cast %103 : vector<8x64xf32> to vector<1x8x64xf32>
    tpu.vector_store %arg6[%c0_29, %c0_30, %c0_31], %106 {strides = array<i32>} : memref<1x8x64xf32, #tpu.memory_space<vmem>>, vector<1x8x64xf32>,
    return
  }
  func.func @transform_0(%arg0: i32) -> (i32, i32, i32, i32) {
    %c0_i32 = arith.constant 0 : i32
    %c0_i32_0 = arith.constant 0 : i32
    %c0_i32_1 = arith.constant 0 : i32
    %c0_i32_2 = arith.constant 0 : i32
    return %arg0, %c0_i32, %c0_i32_0, %c0_i32_1 : i32, i32, i32, i32
  }
  func.func @transform_1(%arg0: i32) -> (i32, i32) {
    %c0_i32 = arith.constant 0 : i32
    %c0_i32_0 = arith.constant 0 : i32
    %c0_i32_1 = arith.constant 0 : i32
    return %c0_i32, %c0_i32_0 : i32, i32
  }
  func.func @transform_2(%arg0: i32) -> (i32, i32, i32) {
    %c0_i32 = arith.constant 0 : i32
    %c0_i32_0 = arith.constant 0 : i32
    %c0_i32_1 = arith.constant 0 : i32
    %c0_i32_2 = arith.constant 0 : i32
    return %c0_i32, %c0_i32_0, %c0_i32_1 : i32, i32, i32
  }
  func.func @transform_3(%arg0: i32) -> (i32, i32) {
    %c0_i32 = arith.constant 0 : i32
    %c0_i32_0 = arith.constant 0 : i32
    %c0_i32_1 = arith.constant 0 : i32
    return %c0_i32, %c0_i32_0 : i32, i32
  }
  func.func @transform_4(%arg0: i32) -> (i32, i32) {
    %c0_i32 = arith.constant 0 : i32
    %c0_i32_0 = arith.constant 0 : i32
    %c0_i32_1 = arith.constant 0 : i32
    return %c0_i32, %c0_i32_0 : i32, i32
  }
  func.func @transform_5(%arg0: i32) -> (i32, i32, i32) {
    %c0_i32 = arith.constant 0 : i32
    %c0_i32_0 = arith.constant 0 : i32
    %c0_i32_1 = arith.constant 0 : i32
    return %arg0, %c0_i32, %c0_i32_0 : i32, i32, i32
  }
}

</mosaic_0001>

<llo_original>
// kernel: tpu_custom_call.1
$region0: #{tpu_custom_call.1}
  #allocation0 [shape = 'u32[]', space=smem, size = 0x4, offset = 0x4, fixed_abs, tag = 'smem constant byte address 0x4 - core index']
  #allocation1 [shape = 'u32[72,128]{1,0:T(1,128)}', space=vmem, size = 0x9000, scoped, tag = 'internal scratch']
  #allocation2 [shape = 'f32[128,4]{1,0:T(8,128)}', space=vmem, size = 0x10000, scoped, tag = 'scratch operand']
  %s0 = inlined_call_operand.vmem [shape: f32[2,16,16,4], index: 0, kind: input, shape index: {}]
  %s1 = inlined_call_operand.vmem [shape: f32[9,4], index: 1, kind: input, shape index: {}]
  %s2 = inlined_call_operand.vmem [shape: f32[1,1,4], index: 2, kind: input, shape index: {}]
  %s3 = inlined_call_operand.vmem [shape: f32[8,4], index: 3, kind: input, shape index: {}]
  %s4 = inlined_call_operand.vmem [shape: f32[8,1], index: 4, kind: input, shape index: {}]
  %s5 = inlined_call_operand.hbm [shape: f32[2,8,64], index: 5, kind: output, shape index: {}]
  %s6 = sld [smem:[#allocation0]]
  $region53: #{tpu_custom_call.1} parent=0
    _
  %s8 = ssub.s32 1, %s6
  %s9 = scalar_select 0, %s8, %s6
  $region1: #{tpu_custom_call.1} parent=0
    #allocation3 [shape = 'u8[8192]{0}', space=vmem, size = 0x2000, scoped, tag = 'output window, operand 0']
    #allocation4 [shape = 's32[2]{0}', space=sflag, size = 0x8, scoped, tag = 'scoped memory for tpu_custom_call.1']
    %10 = vsyncpa [#allocation4], 0
    %s11 = scalar_lea.sflag [#allocation4], 1
    %12 = vsyncpa %s11, 0
    loop: start=0, step=1, limit=4
    $region2: #{tpu_custom_call.1} parent=1 // loop_pre_header
      _
    $region3: #{tpu_custom_call.1} parent=1 // loop_header
      %s14 = sphi 0, %s18
      %p15 = scmp.ge.s32.totalorder %s14, 4
      %s24 = sphi 0, %s26
      %s27 = sphi 0, %s24
      %s28 = sphi 0, %s27
      %s44 = sphi 0, %s28
      %s48 = sphi 0, %s48
      %s50 = sphi 0, %s48
      %s51 = sphi 0, %s50
      %s65 = sphi 0, %s51
      %s69 = sphi 0, %s69
      %s71 = sphi 0, %s69
      %s72 = sphi 0, %s71
      %s86 = sphi 0, %s72
      %s90 = sphi 0, %s90
      %s92 = sphi 0, %s90
      %s93 = sphi 0, %s92
      %s107 = sphi 0, %s93
      %s111 = sphi 0, %s111
      %s113 = sphi 0, %s111
      %s114 = sphi 0, %s113
      %s128 = sphi 0, %s114
      %s134 = sphi 0, %s136
      %s137 = sphi 0, %s134
      %s138 = sphi 0, %s137
      %s154 = sphi 0, %s138
    $region4: #{tpu_custom_call.1} parent=1 // loop_header_branch
      %17 = sbr.rel (%p15) target = $region8
    $region5: #{tpu_custom_call.1} parent=1 // loop_body
      %s19 = ssub.s32 %s14, 1
      %s20 = ssub.s32 %s14, 2
      %s21 = sadd.s32 %s14, 1
      %s22 = ssub.s32 %s14, %s21
      %p23 = scmp.eq.s32.totalorder %s22, 0
      %s25 = sadd.s32 %s24, 1
      %s26 = scalar_select %p23, %s24, %s25
      %p29 = pneg %p23
      %p30 = scmp.eq.s32.totalorder %s14, 1
      %p31 = por %p29, %p30
      %p32 = scmp.ne.s32.totalorder %s24, %s27
      %p33 = scmp.eq.s32.totalorder %s14, 0
      %p34 = por %p32, %p33
      %p35 = scmp.ne.s32.totalorder %s24, %s27
      %p36 = scmp.eq.s32.totalorder %s19, 1
      %p37 = por %p35, %p36
      %p38 = scmp.ne.s32.totalorder %s27, %s28
      %p39 = scmp.eq.s32.totalorder %s19, 0
      %p40 = por %p38, %p39
      %p41 = scmp.ne.s32.totalorder %s27, %s28
      %p42 = scmp.eq.s32.totalorder %s20, 1
      %p43 = por %p41, %p42
      %p45 = scmp.ne.s32.totalorder %s28, %s44
      %p46 = scmp.eq.s32.totalorder %s20, 0
      %p47 = por %p45, %p46
      %s49 = sadd.s32 %s48, 1
      %p52 = scmp.eq.s32.totalorder %s14, 1
      %p53 = scmp.ne.s32.totalorder %s48, %s50
      %p54 = scmp.eq.s32.totalorder %s14, 0
      %p55 = por %p53, %p54
      %p56 = scmp.ne.s32.totalorder %s48, %s50
      %p57 = scmp.eq.s32.totalorder %s19, 1
      %p58 = por %p56, %p57
      %p59 = scmp.ne.s32.totalorder %s50, %s51
      %p60 = scmp.eq.s32.totalorder %s19, 0
      %p61 = por %p59, %p60
      %p62 = scmp.ne.s32.totalorder %s50, %s51
      %p63 = scmp.eq.s32.totalorder %s20, 1
      %p64 = por %p62, %p63
      %p66 = scmp.ne.s32.totalorder %s51, %s65
      %p67 = scmp.eq.s32.totalorder %s20, 0
      %p68 = por %p66, %p67
      %s70 = sadd.s32 %s69, 1
      %p73 = scmp.eq.s32.totalorder %s14, 1
      %p74 = scmp.ne.s32.totalorder %s69, %s71
      %p75 = scmp.eq.s32.totalorder %s14, 0
      %p76 = por %p74, %p75
      %p77 = scmp.ne.s32.totalorder %s69, %s71
      %p78 = scmp.eq.s32.totalorder %s19, 1
      %p79 = por %p77, %p78
      %p80 = scmp.ne.s32.totalorder %s71, %s72
      %p81 = scmp.eq.s32.totalorder %s19, 0
      %p82 = por %p80, %p81
      %p83 = scmp.ne.s32.totalorder %s71, %s72
      %p84 = scmp.eq.s32.totalorder %s20, 1
      %p85 = por %p83, %p84
      %p87 = scmp.ne.s32.totalorder %s72, %s86
      %p88 = scmp.eq.s32.totalorder %s20, 0
      %p89 = por %p87, %p88
      %s91 = sadd.s32 %s90, 1
      %p94 = scmp.eq.s32.totalorder %s14, 1
      %p95 = scmp.ne.s32.totalorder %s90, %s92
      %p96 = scmp.eq.s32.totalorder %s14, 0
      %p97 = por %p95, %p96
      %p98 = scmp.ne.s32.totalorder %s90, %s92
      %p99 = scmp.eq.s32.totalorder %s19, 1
      %p100 = por %p98, %p99
      %p101 = scmp.ne.s32.totalorder %s92, %s93
      %p102 = scmp.eq.s32.totalorder %s19, 0
      %p103 = por %p101, %p102
      %p104 = scmp.ne.s32.totalorder %s92, %s93
      %p105 = scmp.eq.s32.totalorder %s20, 1
      %p106 = por %p104, %p105
      %p108 = scmp.ne.s32.totalorder %s93, %s107
      %p109 = scmp.eq.s32.totalorder %s20, 0
      %p110 = por %p108, %p109
      %s112 = sadd.s32 %s111, 1
      %p115 = scmp.eq.s32.totalorder %s14, 1
      %p116 = scmp.ne.s32.totalorder %s111, %s113
      %p117 = scmp.eq.s32.totalorder %s14, 0
      %p118 = por %p116, %p117
      %p119 = scmp.ne.s32.totalorder %s111, %s113
      %p120 = scmp.eq.s32.totalorder %s19, 1
      %p121 = por %p119, %p120
      %p122 = scmp.ne.s32.totalorder %s113, %s114
      %p123 = scmp.eq.s32.totalorder %s19, 0
      %p124 = por %p122, %p123
      %p125 = scmp.ne.s32.totalorder %s113, %s114
      %p126 = scmp.eq.s32.totalorder %s20, 1
      %p127 = por %p125, %p126
      %p129 = scmp.ne.s32.totalorder %s114, %s128
      %p130 = scmp.eq.s32.totalorder %s20, 0
      %p131 = por %p129, %p130
      %s132 = ssub.s32 %s14, %s21
      %p133 = scmp.eq.s32.totalorder %s132, 0
      %s135 = sadd.s32 %s134, 1
      %s136 = scalar_select %p133, %s134, %s135
      %p139 = pneg %p133
      %p140 = scmp.eq.s32.totalorder %s14, 1
      %p141 = por %p139, %p140
      %p142 = scmp.ne.s32.totalorder %s134, %s137
      %p143 = scmp.eq.s32.totalorder %s14, 0
      %p144 = por %p142, %p143
      %p145 = scmp.ne.s32.totalorder %s134, %s137
      %p146 = scmp.eq.s32.totalorder %s19, 1
      %p147 = por %p145, %p146
      %p148 = scmp.ne.s32.totalorder %s137, %s138
      %p149 = scmp.eq.s32.totalorder %s19, 0
      %p150 = por %p148, %p149
      %p151 = scmp.ne.s32.totalorder %s137, %s138
      %p152 = scmp.eq.s32.totalorder %s20, 1
      %p153 = por %p151, %p152
      %p155 = scmp.ne.s32.totalorder %s138, %s154
      %p156 = scmp.eq.s32.totalorder %s20, 0
      %p157 = por %p155, %p156
      %p158 = scmp.le.s32.totalorder 1, %s14
      %p159 = scmp.lt.s32.totalorder %s14, 3
      %p160 = pnand %p158, %p159
      %p161 = pneg %p160
      // Predicated region
      $region9: #{tpu_custom_call.1} parent=5 // pred_check
        _
      $region10: #{tpu_custom_call.1} parent=5 // pred_check_branch
        %163 = sbr.rel (%p160) target = $region12
      $region11: #{tpu_custom_call.1} parent=5 // pred_region
        %s164 = ssub.s32 %s14, 1
        // Predicated region
        $region13: #{tpu_custom_call.1} parent=11 // pred_check
          %p165 = pneg %p61
        $region14: #{tpu_custom_call.1} parent=11 // pred_check_branch
          %167 = sbr.rel (%p165) target = $region16
        $region15: #{tpu_custom_call.1} parent=11 // pred_region
          _
        $region16: #{tpu_custom_call.1} parent=11 // pred_fallthru
          _
        // Predicated region
        $region17: #{tpu_custom_call.1} parent=11 // pred_check
          %p168 = pneg %p82
        $region18: #{tpu_custom_call.1} parent=11 // pred_check_branch
          %170 = sbr.rel (%p168) target = $region20
        $region19: #{tpu_custom_call.1} parent=11 // pred_region
          _
        $region20: #{tpu_custom_call.1} parent=11 // pred_fallthru
          _
        // Predicated region
        $region21: #{tpu_custom_call.1} parent=11 // pred_check
          %p171 = pneg %p103
        $region22: #{tpu_custom_call.1} parent=11 // pred_check_branch
          %173 = sbr.rel (%p171) target = $region24
        $region23: #{tpu_custom_call.1} parent=11 // pred_region
          _
        $region24: #{tpu_custom_call.1} parent=11 // pred_fallthru
          _
        // Predicated region
        $region25: #{tpu_custom_call.1} parent=11 // pred_check
          %p174 = pneg %p124
        $region26: #{tpu_custom_call.1} parent=11 // pred_check_branch
          %176 = sbr.rel (%p174) target = $region28
        $region27: #{tpu_custom_call.1} parent=11 // pred_region
          _
        $region28: #{tpu_custom_call.1} parent=11 // pred_fallthru
          _
      $region12: #{tpu_custom_call.1} parent=5 // pred_fallthru
        _
      %p177 = scmp.lt.s32.totalorder %s14, 2
      // Predicated region
      $region29: #{tpu_custom_call.1} parent=5 // pred_check
        %p178 = pneg %p177
      $region30: #{tpu_custom_call.1} parent=5 // pred_check_branch
        %180 = sbr.rel (%p178) target = $region32
      $region31: #{tpu_custom_call.1} parent=5 // pred_region
        // Predicated region
        $region33: #{tpu_custom_call.1} parent=31 // pred_check
          %p181 = pneg %p34
        $region34: #{tpu_custom_call.1} parent=31 // pred_check_branch
          %183 = sbr.rel (%p181) target = $region36
        $region35: #{tpu_custom_call.1} parent=31 // pred_region
          %p184 = scmp.lt.s32.totalorder %s14, 1
          %s185 = scalar_select %p184, %s14, 1
          %s186 = smul.addr %s185, 32
          %s187 = smul.addr %s186, 8
          %s188 = scalar_lea.vmem %s0, %s187
        $region36: #{tpu_custom_call.1} parent=31 // pred_fallthru
          _
      $region32: #{tpu_custom_call.1} parent=5 // pred_fallthru
        _
      %p189 = scmp.le.s32.totalorder 1, %s14
      %p190 = scmp.lt.s32.totalorder %s14, 3
      %p191 = pnand %p189, %p190
      %p192 = pneg %p191
      // Predicated region
      $region37: #{tpu_custom_call.1} parent=5 // pred_check
        _
      $region38: #{tpu_custom_call.1} parent=5 // pred_check_branch
        %194 = sbr.rel (%p191) target = $region40
      $region39: #{tpu_custom_call.1} parent=5 // pred_region
        %s195 = ssub.s32 %s14, 1
        %p196 = scmp.lt.s32.totalorder %s19, 1
        %s197 = scalar_select %p196, %s19, 1
        %s198 = smul.addr %s197, 32
        %s199 = smul.addr %s198, 8
        %s200 = scalar_lea.vmem %s0, %s199
        %p201 = pneg %p40
        %p202 = pneg %p37
        %p203 = pneg %p61
        %p204 = pneg %p58
        %p205 = pneg %p82
        %p206 = pneg %p79
        %p207 = pneg %p103
        %p208 = pneg %p100
        %p209 = pneg %p124
        %p210 = pneg %p121
        %p211 = pneg %p150
        %p212 = pneg %p147
        %s213 = sand.u32 %s137, 1
        %s214 = scalar_lea.sflag [#allocation4], %s213
        %s215 = sand.u32 %s137, 1
        %s216 = smul.addr %s215, 8
        %s217 = scalar_lea.vmem [#allocation3], %s216
        %p218 = scmp.lt.s32.totalorder %s19, 1
        %s219 = scalar_select %p218, %s19, 1
        %s220 = smul.addr %s219, 32
        %s221 = smul.addr %s220, 8
        %s222 = scalar_lea.vmem %s0, %s221
        %v223 = vld [vmem:[%s222] sm:$0xff]
        %v224 = vld [vmem:[%s222 + $0x8] sm:$0xff]
        %v225 = vld [vmem:[%s222 + $0x10] sm:$0xff]
        %v226 = vld [vmem:[%s222 + $0x18] sm:$0xff]
        %v227 = vld [vmem:[%s222 + $0x20] sm:$0xff]
        %v228 = vld [vmem:[%s222 + $0x28] sm:$0xff]
        %v229 = vld [vmem:[%s222 + $0x30] sm:$0xff]
        %v230 = vld [vmem:[%s222 + $0x38] sm:$0xff]
        %v231 = vld [vmem:[%s222 + $0x40] sm:$0xff]
        %v232 = vld [vmem:[%s222 + $0x48] sm:$0xff]
        %v233 = vld [vmem:[%s222 + $0x50] sm:$0xff]
        %v234 = vld [vmem:[%s222 + $0x58] sm:$0xff]
        %v235 = vld [vmem:[%s222 + $0x60] sm:$0xff]
        %v236 = vld [vmem:[%s222 + $0x68] sm:$0xff]
        %v237 = vld [vmem:[%s222 + $0x70] sm:$0xff]
        %v238 = vld [vmem:[%s222 + $0x78] sm:$0xff]
        %v239 = vld [vmem:[%s222 + $0x80] sm:$0xff]
        %v240 = vld [vmem:[%s222 + $0x88] sm:$0xff]
        %v241 = vld [vmem:[%s222 + $0x90] sm:$0xff]
        %v242 = vld [vmem:[%s222 + $0x98] sm:$0xff]
        %v243 = vld [vmem:[%s222 + $0xa0] sm:$0xff]
        %v244 = vld [vmem:[%s222 + $0xa8] sm:$0xff]
        %v245 = vld [vmem:[%s222 + $0xb0] sm:$0xff]
        %v246 = vld [vmem:[%s222 + $0xb8] sm:$0xff]
        %v247 = vld [vmem:[%s222 + $0xc0] sm:$0xff]
        %v248 = vld [vmem:[%s222 + $0xc8] sm:$0xff]
        %v249 = vld [vmem:[%s222 + $0xd0] sm:$0xff]
        %v250 = vld [vmem:[%s222 + $0xd8] sm:$0xff]
        %v251 = vld [vmem:[%s222 + $0xe0] sm:$0xff]
        %v252 = vld [vmem:[%s222 + $0xe8] sm:$0xff]
        %v253 = vld [vmem:[%s222 + $0xf0] sm:$0xff]
        %v254 = vld [vmem:[%s222 + $0xf8] sm:$0xff]
        %v255 = vld [vmem:[%s1] sm:$0x1]
        %v256 = vperm.slane %v255, 0
        %v257 = vmul.f32 %v225, %v256
        %v258 = vmul.f32 %v226, %v256
        %v259 = vmul.f32 %v229, %v256
        %v260 = vmul.f32 %v230, %v256
        %v261 = vmul.f32 %v233, %v256
        %v262 = vmul.f32 %v234, %v256
        %v263 = vmul.f32 %v237, %v256
        %v264 = vmul.f32 %v238, %v256
        %v265 = vmul.f32 %v241, %v256
        %v266 = vmul.f32 %v242, %v256
        %v267 = vmul.f32 %v245, %v256
        %v268 = vmul.f32 %v246, %v256
        %v269 = vmul.f32 %v249, %v256
        %v270 = vmul.f32 %v250, %v256
        %v271 = vld [vmem:[%s1 + $0x3] sm:$0x1]
        %v272 = vperm.slane %v271, 0
        %v273 = vmul.f32 %v223, %v272
        %v274 = vmul.f32 %v224, %v272
        %v275 = vmul.f32 %v227, %v272
        %v276 = vmul.f32 %v228, %v272
        %v277 = vmul.f32 %v231, %v272
        %v278 = vmul.f32 %v232, %v272
        %v279 = vmul.f32 %v235, %v272
        %v280 = vmul.f32 %v236, %v272
        %v281 = vmul.f32 %v239, %v272
        %v282 = vmul.f32 %v240, %v272
        %v283 = vmul.f32 %v243, %v272
        %v284 = vmul.f32 %v244, %v272
        %v285 = vmul.f32 %v247, %v272
        %v286 = vmul.f32 %v248, %v272
        %v287 = vmul.f32 %v251, %v272
        %v288 = vmul.f32 %v252, %v272
        %v289 = vadd.f32 %v257, %v273
        %v290 = vadd.f32 %v258, %v274
        %v291 = vadd.f32 %v257, %v275
        %v292 = vadd.f32 %v258, %v276
        %v293 = vadd.f32 %v259, %v277
        %v294 = vadd.f32 %v260, %v278
        %v295 = vadd.f32 %v261, %v279
        %v296 = vadd.f32 %v262, %v280
        %v297 = vadd.f32 %v263, %v281
        %v298 = vadd.f32 %v264, %v282
        %v299 = vadd.f32 %v265, %v283
        %v300 = vadd.f32 %v266, %v284
        %v301 = vadd.f32 %v267, %v285
        %v302 = vadd.f32 %v268, %v286
        %v303 = vadd.f32 %v269, %v287
        %v304 = vadd.f32 %v270, %v288
        %v305 = vld [vmem:[%s1 + $0x6] sm:$0x1]
        %v306 = vperm.slane %v305, 0
        %v307 = vmul.f32 %v225, %v306
        %v308 = vmul.f32 %v226, %v306
        %v309 = vmul.f32 %v229, %v306
        %v310 = vmul.f32 %v230, %v306
        %v311 = vmul.f32 %v233, %v306
        %v312 = vmul.f32 %v234, %v306
        %v313 = vmul.f32 %v237, %v306
        %v314 = vmul.f32 %v238, %v306
        %v315 = vmul.f32 %v241, %v306
        %v316 = vmul.f32 %v242, %v306
        %v317 = vmul.f32 %v245, %v306
        %v318 = vmul.f32 %v246, %v306
        %v319 = vmul.f32 %v249, %v306
        %v320 = vmul.f32 %v250, %v306
        %v321 = vmul.f32 %v253, %v306
        %v322 = vmul.f32 %v254, %v306
        %v323 = vadd.f32 %v289, %v307
        %v324 = vadd.f32 %v290, %v308
        %v325 = vadd.f32 %v291, %v309
        %v326 = vadd.f32 %v292, %v310
        %v327 = vadd.f32 %v293, %v311
        %v328 = vadd.f32 %v294, %v312
        %v329 = vadd.f32 %v295, %v313
        %v330 = vadd.f32 %v296, %v314
        %v331 = vadd.f32 %v297, %v315
        %v332 = vadd.f32 %v298, %v316
        %v333 = vadd.f32 %v299, %v317
        %v334 = vadd.f32 %v300, %v318
        %v335 = vadd.f32 %v301, %v319
        %v336 = vadd.f32 %v302, %v320
        %v337 = vadd.f32 %v303, %v321
        %v338 = vadd.f32 %v304, %v322
        %v339 = vld [vmem:[%s1 + $0x1] sm:$0x1]
        %v340 = vperm.slane %v339, 0
        %v341 = vmul.f32 %v225, %v340
        %v342 = vmul.f32 %v226, %v340
        %v343 = vmul.f32 %v229, %v340
        %v344 = vmul.f32 %v230, %v340
        %v345 = vmul.f32 %v233, %v340
        %v346 = vmul.f32 %v234, %v340
        %v347 = vmul.f32 %v237, %v340
        %v348 = vmul.f32 %v238, %v340
        %v349 = vmul.f32 %v241, %v340
        %v350 = vmul.f32 %v242, %v340
        %v351 = vmul.f32 %v245, %v340
        %v352 = vmul.f32 %v246, %v340
        %v353 = vmul.f32 %v249, %v340
        %v354 = vmul.f32 %v250, %v340
        %v355 = vld [vmem:[%s1 + $0x4] sm:$0x1]
        %v356 = vperm.slane %v355, 0
        %v357 = vmul.f32 %v223, %v356
        %v358 = vmul.f32 %v224, %v356
        %v359 = vmul.f32 %v227, %v356
        %v360 = vmul.f32 %v228, %v356
        %v361 = vmul.f32 %v231, %v356
        %v362 = vmul.f32 %v232, %v356
        %v363 = vmul.f32 %v235, %v356
        %v364 = vmul.f32 %v236, %v356
        %v365 = vmul.f32 %v239, %v356
        %v366 = vmul.f32 %v240, %v356
        %v367 = vmul.f32 %v243, %v356
        %v368 = vmul.f32 %v244, %v356
        %v369 = vmul.f32 %v247, %v356
        %v370 = vmul.f32 %v248, %v356
        %v371 = vmul.f32 %v251, %v356
        %v372 = vmul.f32 %v252, %v356
        %v373 = vadd.f32 %v341, %v357
        %v374 = vadd.f32 %v342, %v358
        %v375 = vadd.f32 %v341, %v359
        %v376 = vadd.f32 %v342, %v360
        %v377 = vadd.f32 %v343, %v361
        %v378 = vadd.f32 %v344, %v362
        %v379 = vadd.f32 %v345, %v363
        %v380 = vadd.f32 %v346, %v364
        %v381 = vadd.f32 %v347, %v365
        %v382 = vadd.f32 %v348, %v366
        %v383 = vadd.f32 %v349, %v367
        %v384 = vadd.f32 %v350, %v368
        %v385 = vadd.f32 %v351, %v369
        %v386 = vadd.f32 %v352, %v370
        %v387 = vadd.f32 %v353, %v371
        %v388 = vadd.f32 %v354, %v372
        %v389 = vld [vmem:[%s1 + $0x7] sm:$0x1]
        %v390 = vperm.slane %v389, 0
        %v391 = vmul.f32 %v225, %v390
        %v392 = vmul.f32 %v226, %v390
        %v393 = vmul.f32 %v229, %v390
        %v394 = vmul.f32 %v230, %v390
        %v395 = vmul.f32 %v233, %v390
        %v396 = vmul.f32 %v234, %v390
        %v397 = vmul.f32 %v237, %v390
        %v398 = vmul.f32 %v238, %v390
        %v399 = vmul.f32 %v241, %v390
        %v400 = vmul.f32 %v242, %v390
        %v401 = vmul.f32 %v245, %v390
        %v402 = vmul.f32 %v246, %v390
        %v403 = vmul.f32 %v249, %v390
        %v404 = vmul.f32 %v250, %v390
        %v405 = vmul.f32 %v253, %v390
        %v406 = vmul.f32 %v254, %v390
        %v407 = vadd.f32 %v373, %v391
        %v408 = vadd.f32 %v374, %v392
        %v409 = vadd.f32 %v375, %v393
        %v410 = vadd.f32 %v376, %v394
        %v411 = vadd.f32 %v377, %v395
        %v412 = vadd.f32 %v378, %v396
        %v413 = vadd.f32 %v379, %v397
        %v414 = vadd.f32 %v380, %v398
        %v415 = vadd.f32 %v381, %v399
        %v416 = vadd.f32 %v382, %v400
        %v417 = vadd.f32 %v383, %v401
        %v418 = vadd.f32 %v384, %v402
        %v419 = vadd.f32 %v385, %v403
        %v420 = vadd.f32 %v386, %v404
        %v421 = vadd.f32 %v387, %v405
        %v422 = vadd.f32 %v388, %v406
        %v423 = vld [vmem:[%s1 + $0x2] sm:$0x1]
        %v424 = vperm.slane %v423, 0
        %v425 = vmul.f32 %v225, %v424
        %v426 = vmul.f32 %v226, %v424
        %v427 = vmul.f32 %v229, %v424
        %v428 = vmul.f32 %v230, %v424
        %v429 = vmul.f32 %v233, %v424
        %v430 = vmul.f32 %v234, %v424
        %v431 = vmul.f32 %v237, %v424
        %v432 = vmul.f32 %v238, %v424
        %v433 = vmul.f32 %v241, %v424
        %v434 = vmul.f32 %v242, %v424
        %v435 = vmul.f32 %v245, %v424
        %v436 = vmul.f32 %v246, %v424
        %v437 = vmul.f32 %v249, %v424
        %v438 = vmul.f32 %v250, %v424
        %v439 = vld [vmem:[%s1 + $0x5] sm:$0x1]
        %v440 = vperm.slane %v439, 0
        %v441 = vmul.f32 %v223, %v440
        %v442 = vmul.f32 %v224, %v440
        %v443 = vmul.f32 %v227, %v440
        %v444 = vmul.f32 %v228, %v440
        %v445 = vmul.f32 %v231, %v440
        %v446 = vmul.f32 %v232, %v440
        %v447 = vmul.f32 %v235, %v440
        %v448 = vmul.f32 %v236, %v440
        %v449 = vmul.f32 %v239, %v440
        %v450 = vmul.f32 %v240, %v440
        %v451 = vmul.f32 %v243, %v440
        %v452 = vmul.f32 %v244, %v440
        %v453 = vmul.f32 %v247, %v440
        %v454 = vmul.f32 %v248, %v440
        %v455 = vmul.f32 %v251, %v440
        %v456 = vmul.f32 %v252, %v440
        %v457 = vadd.f32 %v425, %v441
        %v458 = vadd.f32 %v426, %v442
        %v459 = vadd.f32 %v425, %v443
        %v460 = vadd.f32 %v426, %v444
        %v461 = vadd.f32 %v427, %v445
        %v462 = vadd.f32 %v428, %v446
        %v463 = vadd.f32 %v429, %v447
        %v464 = vadd.f32 %v430, %v448
        %v465 = vadd.f32 %v431, %v449
        %v466 = vadd.f32 %v432, %v450
        %v467 = vadd.f32 %v433, %v451
        %v468 = vadd.f32 %v434, %v452
        %v469 = vadd.f32 %v435, %v453
        %v470 = vadd.f32 %v436, %v454
        %v471 = vadd.f32 %v437, %v455
        %v472 = vadd.f32 %v438, %v456
        %v473 = vld [vmem:[%s1 + $0x8] sm:$0x1]
        %v474 = vperm.slane %v473, 0
        %v475 = vmul.f32 %v225, %v474
        %v476 = vmul.f32 %v226, %v474
        %v477 = vmul.f32 %v229, %v474
        %v478 = vmul.f32 %v230, %v474
        %v479 = vmul.f32 %v233, %v474
        %v480 = vmul.f32 %v234, %v474
        %v481 = vmul.f32 %v237, %v474
        %v482 = vmul.f32 %v238, %v474
        %v483 = vmul.f32 %v241, %v474
        %v484 = vmul.f32 %v242, %v474
        %v485 = vmul.f32 %v245, %v474
        %v486 = vmul.f32 %v246, %v474
        %v487 = vmul.f32 %v249, %v474
        %v488 = vmul.f32 %v250, %v474
        %v489 = vmul.f32 %v253, %v474
        %v490 = vmul.f32 %v254, %v474
        %v491 = vadd.f32 %v457, %v475
        %v492 = vadd.f32 %v458, %v476
        %v493 = vadd.f32 %v459, %v477
        %v494 = vadd.f32 %v460, %v478
        %v495 = vadd.f32 %v461, %v479
        %v496 = vadd.f32 %v462, %v480
        %v497 = vadd.f32 %v463, %v481
        %v498 = vadd.f32 %v464, %v482
        %v499 = vadd.f32 %v465, %v483
        %v500 = vadd.f32 %v466, %v484
        %v501 = vadd.f32 %v467, %v485
        %v502 = vadd.f32 %v468, %v486
        %v503 = vadd.f32 %v469, %v487
        %v504 = vadd.f32 %v470, %v488
        %v505 = vadd.f32 %v471, %v489
        %v506 = vadd.f32 %v472, %v490
        %v507 = vlaneseq
        %v508 = vshrl.u32 %v507, 7
        %v509 = vadd.s32 %v508, 8
        %vm510 = vcmp.eq.s32.totalorder %v508, 0
        %vm511 = vcmp.eq.s32.totalorder %v509, 0
        %v512 = vrot.slane %v323, 7
        %v513 = vrot.slane %v325, 7
        %v514 = vrot.slane %v327, 7
        %v515 = vrot.slane %v329, 7
        %v516 = vrot.slane %v331, 7
        %v517 = vrot.slane %v333, 7
        %v518 = vrot.slane %v335, 7
        %v519 = vrot.slane %v337, 7
        %v520 = vrot.slane %v324, 7
        %v521 = vrot.slane %v326, 7
        %v522 = vrot.slane %v328, 7
        %v523 = vrot.slane %v330, 7
        %v524 = vrot.slane %v332, 7
        %v525 = vrot.slane %v334, 7
        %v526 = vrot.slane %v336, 7
        %v527 = vrot.slane %v338, 7
        %vm528 = vcmp.lt.s32.totalorder %v508, 1
        %v529 = vsel %vm528, %v512, %v520
        %v530 = vsel %vm528, %v513, %v521
        %v531 = vsel %vm528, %v514, %v522
        %v532 = vsel %vm528, %v515, %v523
        %v533 = vsel %vm528, %v516, %v524
        %v534 = vsel %vm528, %v517, %v525
        %v535 = vsel %vm528, %v518, %v526
        %v536 = vsel %vm528, %v519, %v527
        %v537 = vsel %vm528, %v520, %v512
        %v538 = vsel %vm528, %v521, %v513
        %v539 = vsel %vm528, %v522, %v514
        %v540 = vsel %vm528, %v523, %v515
        %v541 = vsel %vm528, %v524, %v516
        %v542 = vsel %vm528, %v525, %v517
        %v543 = vsel %vm528, %v526, %v518
        %v544 = vsel %vm528, %v527, %v519
        %v545 = vperm.slane %v323, 1
        %v546 = vperm.slane %v325, 1
        %v547 = vperm.slane %v327, 1
        %v548 = vperm.slane %v329, 1
        %v549 = vperm.slane %v331, 1
        %v550 = vperm.slane %v333, 1
        %v551 = vperm.slane %v335, 1
        %v552 = vperm.slane %v337, 1
        %v553 = vsel %vm510, %v545, %v537
        %v554 = vsel %vm511, %v545, %v529
        %v555 = vsel %vm510, %v546, %v538
        %v556 = vsel %vm511, %v546, %v530
        %v557 = vsel %vm510, %v547, %v539
        %v558 = vsel %vm511, %v547, %v531
        %v559 = vsel %vm510, %v548, %v540
        %v560 = vsel %vm511, %v548, %v532
        %v561 = vsel %vm510, %v549, %v541
        %v562 = vsel %vm511, %v549, %v533
        %v563 = vsel %vm510, %v550, %v542
        %v564 = vsel %vm511, %v550, %v534
        %v565 = vsel %vm510, %v551, %v543
        %v566 = vsel %vm511, %v551, %v535
        %v567 = vsel %vm510, %v552, %v544
        %v568 = vsel %vm511, %v552, %v536
        %vm569 = vcmp.eq.s32.totalorder %v508, 15
        %vm570 = vcmp.eq.s32.totalorder %v509, 15
        %v571 = vrot.slane %v491, 1
        %v572 = vrot.slane %v493, 1
        %v573 = vrot.slane %v495, 1
        %v574 = vrot.slane %v497, 1
        %v575 = vrot.slane %v499, 1
        %v576 = vrot.slane %v501, 1
        %v577 = vrot.slane %v503, 1
        %v578 = vrot.slane %v505, 1
        %v579 = vrot.slane %v492, 1
        %v580 = vrot.slane %v494, 1
        %v581 = vrot.slane %v496, 1
        %v582 = vrot.slane %v498, 1
        %v583 = vrot.slane %v500, 1
        %v584 = vrot.slane %v502, 1
        %v585 = vrot.slane %v504, 1
        %v586 = vrot.slane %v506, 1
        %vm587 = vcmp.lt.s32.totalorder %v508, 7
        %v588 = vsel %vm587, %v571, %v579
        %v589 = vsel %vm587, %v572, %v580
        %v590 = vsel %vm587, %v573, %v581
        %v591 = vsel %vm587, %v574, %v582
        %v592 = vsel %vm587, %v575, %v583
        %v593 = vsel %vm587, %v576, %v584
        %v594 = vsel %vm587, %v577, %v585
        %v595 = vsel %vm587, %v578, %v586
        %v596 = vsel %vm587, %v579, %v571
        %v597 = vsel %vm587, %v580, %v572
        %v598 = vsel %vm587, %v581, %v573
        %v599 = vsel %vm587, %v582, %v574
        %v600 = vsel %vm587, %v583, %v575
        %v601 = vsel %vm587, %v584, %v576
        %v602 = vsel %vm587, %v585, %v577
        %v603 = vsel %vm587, %v586, %v578
        %v604 = vperm.slane %v492, 6
        %v605 = vperm.slane %v494, 6
        %v606 = vperm.slane %v496, 6
        %v607 = vperm.slane %v498, 6
        %v608 = vperm.slane %v500, 6
        %v609 = vperm.slane %v502, 6
        %v610 = vperm.slane %v504, 6
        %v611 = vperm.slane %v506, 6
        %v612 = vsel %vm569, %v604, %v588
        %v613 = vsel %vm570, %v604, %v596
        %v614 = vsel %vm569, %v605, %v589
        %v615 = vsel %vm570, %v605, %v597
        %v616 = vsel %vm569, %v606, %v590
        %v617 = vsel %vm570, %v606, %v598
        %v618 = vsel %vm569, %v607, %v591
        %v619 = vsel %vm570, %v607, %v599
        %v620 = vsel %vm569, %v608, %v592
        %v621 = vsel %vm570, %v608, %v600
        %v622 = vsel %vm569, %v609, %v593
        %v623 = vsel %vm570, %v609, %v601
        %v624 = vsel %vm569, %v610, %v594
        %v625 = vsel %vm570, %v610, %v602
        %v626 = vsel %vm569, %v611, %v595
        %v627 = vsel %vm570, %v611, %v603
        %v628 = vadd.f32 %v407, %v553
        %v629 = vadd.f32 %v408, %v554
        %v630 = vadd.f32 %v409, %v555
        %v631 = vadd.f32 %v410, %v556
        %v632 = vadd.f32 %v411, %v557
        %v633 = vadd.f32 %v412, %v558
        %v634 = vadd.f32 %v413, %v559
        %v635 = vadd.f32 %v414, %v560
        %v636 = vadd.f32 %v415, %v561
        %v637 = vadd.f32 %v416, %v562
        %v638 = vadd.f32 %v417, %v563
        %v639 = vadd.f32 %v418, %v564
        %v640 = vadd.f32 %v419, %v565
        %v641 = vadd.f32 %v420, %v566
        %v642 = vadd.f32 %v421, %v567
        %v643 = vadd.f32 %v422, %v568
        %v644 = vadd.f32 %v628, %v612
        %v645 = vadd.f32 %v629, %v613
        %v646 = vadd.f32 %v630, %v614
        %v647 = vadd.f32 %v631, %v615
        %v648 = vadd.f32 %v632, %v616
        %v649 = vadd.f32 %v633, %v617
        %v650 = vadd.f32 %v634, %v618
        %v651 = vadd.f32 %v635, %v619
        %v652 = vadd.f32 %v636, %v620
        %v653 = vadd.f32 %v637, %v621
        %v654 = vadd.f32 %v638, %v622
        %v655 = vadd.f32 %v639, %v623
        %v656 = vadd.f32 %v640, %v624
        %v657 = vadd.f32 %v641, %v625
        %v658 = vadd.f32 %v642, %v626
        %v659 = vadd.f32 %v643, %v627
        %v660 = vld [vmem:[%s2] sm:$0x1]
        %v662 = vperm.slane %v660, 0
        %v664 = vadd.f32 %v644, %v662
        %v665 = vadd.f32 %v645, %v662
        %v666 = vadd.f32 %v646, %v662
        %v667 = vadd.f32 %v647, %v662
        %v668 = vadd.f32 %v648, %v662
        %v669 = vadd.f32 %v649, %v662
        %v670 = vadd.f32 %v650, %v662
        %v671 = vadd.f32 %v651, %v662
        %v672 = vadd.f32 %v652, %v662
        %v673 = vadd.f32 %v653, %v662
        %v674 = vadd.f32 %v654, %v662
        %v675 = vadd.f32 %v655, %v662
        %v676 = vadd.f32 %v656, %v662
        %v677 = vadd.f32 %v657, %v662
        %v678 = vadd.f32 %v658, %v662
        %v679 = vadd.f32 %v659, %v662
        %v680 = vmax.f32 %v664, 0.0
        %v681 = vmax.f32 %v665, 0.0
        %v682 = vmax.f32 %v666, 0.0
        %v683 = vmax.f32 %v667, 0.0
        %v684 = vmax.f32 %v668, 0.0
        %v685 = vmax.f32 %v669, 0.0
        %v686 = vmax.f32 %v670, 0.0
        %v687 = vmax.f32 %v671, 0.0
        %v688 = vmax.f32 %v672, 0.0
        %v689 = vmax.f32 %v673, 0.0
        %v690 = vmax.f32 %v674, 0.0
        %v691 = vmax.f32 %v675, 0.0
        %v692 = vmax.f32 %v676, 0.0
        %v693 = vmax.f32 %v677, 0.0
        %v694 = vmax.f32 %v678, 0.0
        %v695 = vmax.f32 %v679, 0.0
        %v696 = vmin.f32 %v680, 6.0
        %v697 = vmin.f32 %v681, 6.0
        %v698 = vmin.f32 %v682, 6.0
        %v699 = vmin.f32 %v683, 6.0
        %v700 = vmin.f32 %v684, 6.0
        %v701 = vmin.f32 %v685, 6.0
        %v702 = vmin.f32 %v686, 6.0
        %v703 = vmin.f32 %v687, 6.0
        %v704 = vmin.f32 %v688, 6.0
        %v705 = vmin.f32 %v689, 6.0
        %v706 = vmin.f32 %v690, 6.0
        %v707 = vmin.f32 %v691, 6.0
        %v708 = vmin.f32 %v692, 6.0
        %v709 = vmin.f32 %v693, 6.0
        %v710 = vmin.f32 %v694, 6.0
        %v711 = vmin.f32 %v695, 6.0
        %vm712 = vcmask 31744
        %713 = vst.msk [vmem:[#allocation2] sm:$0xff] %vm712, %v696
        %714 = vst.msk [vmem:[#allocation2 + $0x8] sm:$0xff] %vm712, %v697
        %715 = vst.msk [vmem:[#allocation2 + $0x10] sm:$0xff] %vm712, %v698
        %716 = vst.msk [vmem:[#allocation2 + $0x18] sm:$0xff] %vm712, %v699
        %717 = vst.msk [vmem:[#allocation2 + $0x20] sm:$0xff] %vm712, %v700
        %718 = vst.msk [vmem:[#allocation2 + $0x28] sm:$0xff] %vm712, %v701
        %719 = vst.msk [vmem:[#allocation2 + $0x30] sm:$0xff] %vm712, %v702
        %720 = vst.msk [vmem:[#allocation2 + $0x38] sm:$0xff] %vm712, %v703
        %721 = vst.msk [vmem:[#allocation2 + $0x40] sm:$0xff] %vm712, %v704
        %722 = vst.msk [vmem:[#allocation2 + $0x48] sm:$0xff] %vm712, %v705
        %723 = vst.msk [vmem:[#allocation2 + $0x50] sm:$0xff] %vm712, %v706
        %724 = vst.msk [vmem:[#allocation2 + $0x58] sm:$0xff] %vm712, %v707
        %725 = vst.msk [vmem:[#allocation2 + $0x60] sm:$0xff] %vm712, %v708
        %726 = vst.msk [vmem:[#allocation2 + $0x68] sm:$0xff] %vm712, %v709
        %727 = vst.msk [vmem:[#allocation2 + $0x70] sm:$0xff] %vm712, %v710
        %728 = vst.msk [vmem:[#allocation2 + $0x78] sm:$0xff] %vm712, %v711
        %v729 = vld [vmem:[#allocation2] ss:$2 sm:$0xff]
        %s730 = scalar_lea.vmem [#allocation2], 16
        %v731 = vld [vmem:[%s730] ss:$2 sm:$0xff]
        %s732 = scalar_lea.vmem [#allocation2], 32
        %v733 = vld [vmem:[%s732] ss:$2 sm:$0xff]
        %s734 = scalar_lea.vmem [#allocation2], 48
        %v735 = vld [vmem:[%s734] ss:$2 sm:$0xff]
        %s736 = scalar_lea.vmem [#allocation2], 64
        %v737 = vld [vmem:[%s736] ss:$2 sm:$0xff]
        %s738 = scalar_lea.vmem [#allocation2], 80
        %v739 = vld [vmem:[%s738] ss:$2 sm:$0xff]
        %s740 = scalar_lea.vmem [#allocation2], 96
        %v741 = vld [vmem:[%s740] ss:$2 sm:$0xff]
        %s742 = scalar_lea.vmem [#allocation2], 112
        %v743 = vld [vmem:[%s742] ss:$2 sm:$0xff]
        %v744 = vld [vmem:[%s3] sm:$0xff]
        %v745 = vld [vmem:[%s4] sm:$0xff]
        %747 = vset.pattern.permute.xlu0 0
        %748 = vperm.xlu0 %747, %v745
        %v749 = vpop.permute.xlu0 %748
        %v752 = vsel %vm712, %v744, 0
        %v755 = vsel %vm712, %v729, 0
        %v758 = vsel %vm712, %v731, 0
        %v761 = vsel %vm712, %v733, 0
        %v764 = vsel %vm712, %v735, 0
        %v767 = vsel %vm712, %v737, 0
        %v770 = vsel %vm712, %v739, 0
        %v773 = vsel %vm712, %v741, 0
        %v776 = vsel %vm712, %v743, 0
        %778 = vmatpush.xpose.msra.mxu0 0.0
        %779 = vmatpush.xpose.msra.mxu0 0.0
        %780 = vmatpush.xpose.msra.mxu0 0.0
        %781 = vmatpush.xpose.msra.mxu0 0.0
        %782 = vmatpush.xpose.msra.mxu0 0.0
        %783 = vmatpush.xpose.msra.mxu0 0.0
        %784 = vmatpush.xpose.msra.mxu0 0.0
        %785 = vmatpush.xpose.msra.mxu0 0.0
        %786 = vmatpush.xpose.msra.mxu0 %v776
        %787 = vmatpush.xpose.msra.mxu0 %v773
        %788 = vmatpush.xpose.msra.mxu0 %v770
        %789 = vmatpush.xpose.msra.mxu0 %v767
        %790 = vmatpush.xpose.msra.mxu0 %v764
        %791 = vmatpush.xpose.msra.mxu0 %v761
        %792 = vmatpush.xpose.msra.mxu0 %v758
        %793 = vmatpush.xpose.msra.mxu0 %v755
        %794 = vmatmul.f32.gmra.mxu0 %v752
        %v795 = vpop.f32.mrf.mxu0
        %v796 = vadd.f32 %v749, %v795
        %797 = vdwg.mxu0
        %v798 = vmax.f32 %v796, 0.0
        %v799 = vmin.f32 %v798, 6.0
        %vm800 = vcmask 523264
        %801 = vst.msk [vmem:[%s217] sm:$0xff] %vm800, %v799
        %s802 = sand.u32 %s137, 1
        %s803 = scalar_lea.sflag [#allocation4], %s802
        %s804 = sand.u32 %s137, 1
        %s805 = smul.addr %s804, 8
        %s806 = scalar_lea.vmem [#allocation3], %s805
        // Predicated region
        $region41: #{tpu_custom_call.1} parent=39 // pred_check
          %p807 = pneg %p147
        $region42: #{tpu_custom_call.1} parent=39 // pred_check_branch
          %809 = sbr.rel (%p807) target = $region44
        $region43: #{tpu_custom_call.1} parent=39 // pred_region
          %811 = vsyncadd %s803, 0
          %s812 = smul.addr %s19, 8
          %s813 = scalar_lea.hbm %s5, %s812
          %s815 = sshll.u32 %s806, 4
          %s816 = int_to_ptr.vmem [resolvable:$true] %s815
          %s817 = sshll.u32 %s813, 4
          %s818 = int_to_ptr.hbm [resolvable:$true] %s817
          %820 = dma.vmem_to_hbm [thread:$0]  %s816, 128, %s818, %s803
        $region44: #{tpu_custom_call.1} parent=39 // pred_fallthru
          _
      $region40: #{tpu_custom_call.1} parent=5 // pred_fallthru
        _
      %p821 = scmp.le.s32.totalorder 2, %s14
      // Predicated region
      $region45: #{tpu_custom_call.1} parent=5 // pred_check
        %p822 = pneg %p821
      $region46: #{tpu_custom_call.1} parent=5 // pred_check_branch
        %824 = sbr.rel (%p822) target = $region48
      $region47: #{tpu_custom_call.1} parent=5 // pred_region
        %s825 = ssub.s32 %s14, 2
        // Predicated region
        $region49: #{tpu_custom_call.1} parent=47 // pred_check
          %p826 = pneg %p153
        $region50: #{tpu_custom_call.1} parent=47 // pred_check_branch
          %828 = sbr.rel (%p826) target = $region52
        $region51: #{tpu_custom_call.1} parent=47 // pred_region
          %s829 = sand.u32 %s138, 1
          %s830 = scalar_lea.sflag [#allocation4], %s829
          %s831 = sand.u32 %s138, 1
          %s832 = smul.addr %s831, 8
          %s833 = scalar_lea.vmem [#allocation3], %s832
          %835 = dma.done %s830, 128
        $region52: #{tpu_custom_call.1} parent=47 // pred_fallthru
          _
      $region48: #{tpu_custom_call.1} parent=5 // pred_fallthru
        _
    $region6: #{tpu_custom_call.1} parent=1 // loop_footer
      %s18 = sadd.s32 1, %s14
    $region7: #{tpu_custom_call.1} parent=1 // loop_footer_branch
      %13 = sbr.rel target = $region3
    $region8: #{tpu_custom_call.1} parent=1 // loop_exit
      _
    %836 = vsyncpa [#allocation4], 1
    %s837 = scalar_lea.sflag [#allocation4], 1
    %838 = vsyncpa %s837, 1

</llo_original>
